<compile_context>
chip_gen: v5e
topology: v5e:2x2
jax: 0.10.0
libtpu: 0.0.40
codegen_flags: <defaults>
</compile_context>

<pallas_src>
import math
from functools import partial

import jax
import jax.numpy as jnp
import numpy as np
from jax.experimental import pallas as pl
from jax.experimental.pallas import tpu as pltpu

_LANE = 128


def _round_up(v, m):
    return (v + m - 1) // m * m


# --------------------------------------------------------------------------- #
# Kernel: one lane-contracted GEMM + bias
# --------------------------------------------------------------------------- #
def _vgg_kernel(x_ref, w_ref, b_ref, out_ref):
    """out = x @ w + b   (full-spatial conv + folded BN + folded 1x1 convs)."""
    y = jnp.dot(x_ref[...], w_ref[...], preferred_element_type=jnp.float32)
    out_ref[...] = (y + b_ref[...]).astype(out_ref.dtype)


# --------------------------------------------------------------------------- #
# Tiling heuristic
# --------------------------------------------------------------------------- #
def _pick_block_n(n, k, cout_pad, elem_bytes, budget=8 * 1024 * 1024):
    """Largest batch tile (<=512, multiple of 8) whose double-buffered working
    set stays under `budget` -- well inside the 16 MiB v5e / 32 MiB v6e-v7x
    default scoped-VMEM limits, so no vmem_limit_bytes bump is needed."""
    fixed = k * cout_pad * elem_bytes + cout_pad * 4      # weight + bias (resident)
    per_row = k * elem_bytes + cout_pad * 4               # x tile row + f32 out row
    avail = max(budget // 2 - fixed, per_row)             # //2: double buffering
    bn = int(min(512, max(8, (avail // per_row) // 8 * 8)))
    return n if bn >= n else bn


# --------------------------------------------------------------------------- #
# Wrapper
# --------------------------------------------------------------------------- #
@partial(jax.jit, static_argnames=("pool_channel", "mxu_dtype"))
def vgg_forward(x, params, *, pool_channel=None, mxu_dtype=jnp.bfloat16):
    """x: (N, C_in, H, W) f32, H == W == conv kernel size.  Returns (N, C_out) f32."""
    N, C_in, H, W = x.shape
    w_fc = params["w_fc"]                       # (Cm, Cm_or_Cin, kh, kw)
    Cm, _, kh, kw = w_fc.shape
    if (H, W) != (kh, kw):
        # TODO(synk): conv output spatial > 1x1 (input larger than kernel) not implemented.
        raise NotImplementedError("input spatial must equal the conv kernel size")

    # ---- host-side folding (all linear, exact in f32) ----
    eps = 1e-5
    scale = params["bn_gamma"] / jnp.sqrt(params["bn_var"] + eps)   # eval-mode BN
    bias = params["bn_beta"] - params["bn_mean"] * scale

    if pool_channel:
        # ch_reduce (1x1 conv) folded into the full-spatial conv weight.
        w1 = jnp.einsum("omhw,mc->ochw", w_fc, params["w_reduce"])  # (Cm, C_in, H, W)
    else:
        w1 = w_fc
    w1 = w1 * scale[:, None, None, None]                            # fold BN scale

    K = C_in * H * W
    w1 = w1.reshape(Cm, K).T                                        # (K, Cm), pre-transposed

    if pool_channel:
        # ch_expand (1x1 conv) folded on the right: one GEMM total.
        C_out = params["w_expand"].shape[0]
        w_total = w1 @ params["w_expand"].T                         # (K, C_out)
        b_total = bias @ params["w_expand"].T                       # (C_out,)
    else:
        C_out = Cm
        w_total = w1
        b_total = bias

    cout_pad = _round_up(max(C_out, _LANE), _LANE)                  # lane-dense output
    w_total = jnp.pad(w_total, ((0, 0), (0, cout_pad - C_out))).astype(mxu_dtype)
    b_total = jnp.pad(b_total[None, :], ((0, 0), (0, cout_pad - C_out)))  # (1, Co_pad) f32

    elem_bytes = jnp.dtype(mxu_dtype).itemsize
    bn = _pick_block_n(N, K, cout_pad, elem_bytes)
    grid = (pl.cdiv(N, bn),)

    x_flat = x.reshape(N, K).astype(mxu_dtype)    # bf16 halves HBM/VMEM bytes per tile

    out = pl.pallas_call(
        _vgg_kernel,
        out_shape=jax.ShapeDtypeStruct((N, cout_pad), jnp.float32),
        grid=grid,
        in_specs=[
            pl.BlockSpec((bn, K), lambda i: (i, 0)),          # batch tile, pipelined
            pl.BlockSpec((K, cout_pad), lambda i: (0, 0)),    # weight: grid-invariant
            pl.BlockSpec((1, cout_pad), lambda i: (0, 0)),    # bias:   grid-invariant
        ],
        out_specs=pl.BlockSpec((bn, cout_pad), lambda i: (i, 0)),
        compiler_params=pltpu.CompilerParams(
            dimension_semantics=("parallel",)),   # 2 TCs on v7x; harmless on v5e/v6e
    )(x_flat, w_total, b_total)

    return out[:, :C_out]                          # == torch.flatten(out, start_dim=1)


# --------------------------------------------------------------------------- #
# Synthetic parameters + float64 reference
# --------------------------------------------------------------------------- #
def init_params(key, in_ch, size, pool_channel=None):
    """Synthetic parameters with PyTorch-default-style inits (eval-mode BN stats)."""
    cm = pool_channel if pool_channel else in_ch
    ks = jax.random.split(key, 7)

    def conv_w(k, shape, fan_in):
        b = 1.0 / math.sqrt(fan_in)
        return jax.random.uniform(k, shape, jnp.float32, -b, b)

    p = {
        # Conv2d(cm, cm, size, bias=False)
        "w_fc": conv_w(ks[0], (cm, cm, size, size), cm * size * size),
        # BatchNorm2d(cm): eval-mode running stats + affine
        "bn_gamma": jax.random.uniform(ks[1], (cm,), jnp.float32, 0.5, 1.5),
        "bn_beta": 0.1 * jax.random.normal(ks[2], (cm,), jnp.float32),
        "bn_mean": 0.1 * jax.random.normal(ks[3], (cm,), jnp.float32),
        "bn_var": jax.random.uniform(ks[4], (cm,), jnp.float32, 0.5, 1.5),
    }
    if pool_channel:
        # Conv2d(in_ch, cm, 1, bias=False) / Conv2d(cm, in_ch, 1, bias=False), squeezed
        p["w_reduce"] = conv_w(ks[5], (cm, in_ch), in_ch)
        p["w_expand"] = conv_w(ks[6], (in_ch, cm), cm)
    return p


def vgg_reference_np(x, params, pool_channel=None, eps=1e-5):
    """Float64 NumPy reference mirroring VGG.forward (eval-mode BatchNorm)."""
    x = np.asarray(x, np.float64)
    p = {k: np.asarray(v, np.float64) for k, v in params.items()}
    if pool_channel:
        x = np.einsum("mc,nchw->nmhw", p["w_reduce"], x)          # ch_reduce (1x1 conv)
    conv = np.einsum("nchw,ochw->no", x, p["w_fc"])               # full-spatial conv -> 1x1
    scale = p["bn_gamma"] / np.sqrt(p["bn_var"] + eps)
    out = conv * scale + (p["bn_beta"] - p["bn_mean"] * scale)    # BatchNorm2d (eval)
    if pool_channel:
        out = out @ p["w_expand"].T                               # ch_expand (1x1 conv)
    return out                                                    # flatten of (N, C, 1, 1)


# --------------------------------------------------------------------------- #
if __name__ == "__main__":
    key = jax.random.PRNGKey(0)
    kx, kp1, kp2 = jax.random.split(key, 3)

    N, C, S = 2, 4, 16                       # batch, in_ch, spatial == conv kernel size
    x = jax.random.normal(kx, (N, C, S, S), jnp.float32)

    # ---- default path: VGG(in_ch=4, size=16) ----
    p = init_params(kp1, in_ch=C, size=S)
    out = jax.block_until_ready(vgg_forward(x, p))
    ref = vgg_reference_np(x, p)
    np.testing.assert_allclose(np.asarray(out), ref, rtol=2e-2, atol=2e-2)

    # ---- pool_channel path: VGG(in_ch=4, size=16, pool_channel=8) ----
    pc = 8
    p2 = init_params(kp2, in_ch=C, size=S, pool_channel=pc)
    out2 = jax.block_until_ready(vgg_forward(x, p2, pool_channel=pc))
    ref2 = vgg_reference_np(x, p2, pool_channel=pc)
    np.testing.assert_allclose(np.asarray(out2), ref2, rtol=2e-2, atol=2e-2)

    print("KERNEL_OK")
</pallas_src>

<mosaic_0001>
module attributes {stable_mosaic.version = 11 : i64} {
  func.func @_vgg_kernel(%arg0: i32, %arg1: memref<2x1024xbf16, #tpu.memory_space<vmem>>, %arg2: memref<1024x128xbf16, #tpu.memory_space<vmem>>, %arg3: memref<1x128xf32, #tpu.memory_space<vmem>>, %arg4: memref<2x128xf32, #tpu.memory_space<vmem>>) attributes {dimension_semantics = [#tpu.dimension_semantics<parallel>], iteration_bounds = array<i64: 1>, scalar_prefetch = 0 : i64, scratch_operands = 0 : i64, tpu.core_type = #tpu.core_type<tc>, window_params = [{transform_indices = @transform_0, window_bounds = array<i64: 2, 1024>}, {pipeline_mode = #tpu.pipeline_mode<synchronous>, transform_indices = @transform_1, window_bounds = array<i64: 1024, 128>}, {pipeline_mode = #tpu.pipeline_mode<synchronous>, transform_indices = @transform_2, window_bounds = array<i64: 1, 128>}, {transform_indices = @transform_3, window_bounds = array<i64: 2, 128>}]} {
    %c0 = arith.constant 0 : index
    %c0_0 = arith.constant 0 : index
    %0 = vector.load %arg1[%c0, %c0_0] : memref<2x1024xbf16, #tpu.memory_space<vmem>>, vector<2x1024xbf16>
    %c0_1 = arith.constant 0 : index
    %c0_2 = arith.constant 0 : index
    %1 = vector.load %arg2[%c0_1, %c0_2] : memref<1024x128xbf16, #tpu.memory_space<vmem>>, vector<1024x128xbf16>
    %cst = arith.constant dense<0.000000e+00> : vector<2x128xf32>
    %2 = tpu.matmul %0, %1, %cst {dimension_numbers = #tpu.dot_dimension_numbers<[1], [0], [0], [1], [0, 0, 1, 1], [], []>} : vector<2x1024xbf16>, vector<1024x128xbf16>, vector<2x128xf32> -> vector<2x128xf32>
    %c0_3 = arith.constant 0 : index
    %c0_4 = arith.constant 0 : index
    %3 = vector.load %arg3[%c0_3, %c0_4] : memref<1x128xf32, #tpu.memory_space<vmem>>, vector<1x128xf32>
    %4 = vector.broadcast %3 : vector<1x128xf32> to vector<2x128xf32>
    %5 = arith.addf %2, %4 : vector<2x128xf32>
    %c0_5 = arith.constant 0 : index
    %c0_6 = arith.constant 0 : index
    %6 = vector.load %arg4[%c0_5, %c0_6] : memref<2x128xf32, #tpu.memory_space<vmem>>, vector<2x128xf32>
    tpu.vector_store %arg4[%c0_5, %c0_6], %5 {strides = array<i32>} : memref<2x128xf32, #tpu.memory_space<vmem>>, vector<2x128xf32>,
    return
  }
  func.func @transform_0(%arg0: i32) -> (i32, i32) {
    %c0_i32 = arith.constant 0 : i32
    %c0_i32_0 = arith.constant 0 : i32
    return %arg0, %c0_i32 : i32, i32
  }
  func.func @transform_1(%arg0: i32) -> (i32, i32) {
    %c0_i32 = arith.constant 0 : i32
    %c0_i32_0 = arith.constant 0 : i32
    %c0_i32_1 = arith.constant 0 : i32
    return %c0_i32, %c0_i32_0 : i32, i32
  }
  func.func @transform_2(%arg0: i32) -> (i32, i32) {
    %c0_i32 = arith.constant 0 : i32
    %c0_i32_0 = arith.constant 0 : i32
    %c0_i32_1 = arith.constant 0 : i32
    return %c0_i32, %c0_i32_0 : i32, i32
  }
  func.func @transform_3(%arg0: i32) -> (i32, i32) {
    %c0_i32 = arith.constant 0 : i32
    %c0_i32_0 = arith.constant 0 : i32
    return %arg0, %c0_i32 : i32, i32
  }
}

</mosaic_0001>

<llo_original>
// kernel: vgg_forward.1
$region0: #{vgg_forward.1}
  #allocation0 [shape = 'u32[]', space=smem, size = 0x4, offset = 0x4, fixed_abs, tag = 'smem constant byte address 0x4 - core index']
  #allocation1 [shape = 'u32[72,128]{1,0:T(1,128)}', space=vmem, size = 0x9000, scoped, tag = 'internal scratch']
  %s0 = inlined_call_operand.vmem [shape: bf16[2,1024], index: 0, kind: input, shape index: {}]
  %s1 = inlined_call_operand.vmem [shape: bf16[1024,128], index: 1, kind: input, shape index: {}]
  %s2 = inlined_call_operand.vmem [shape: f32[1,128], index: 2, kind: input, shape index: {}]
  %s3 = inlined_call_operand.hbm [shape: f32[2,128], index: 3, kind: output, shape index: {}]
  %s4 = sld [smem:[#allocation0]]
  $region22: #{vgg_forward.1} parent=0
    _
  %s6 = ssub.s32 1, %s4
  %s7 = scalar_select 0, %s6, %s4
  $region1: #{vgg_forward.1} parent=0
    #allocation2 [shape = 'u8[1024]{0}', space=vmem, size = 0x400, scoped, tag = 'output window, operand 0, single buffered']
    #allocation3 [shape = 's32[1]{0}', space=sflag, size = 0x4, scoped, tag = 'scoped memory for vgg_forward.1']
    %8 = vsyncpa [#allocation3], 0
    // Predicated region
    $region2: #{vgg_forward.1} parent=1 // pred_check
      _
    $region3: #{vgg_forward.1} parent=1 // pred_check_branch
      %10 = sbr.rel (0) target = $region5
    $region4: #{vgg_forward.1} parent=1 // pred_region
      _
    $region5: #{vgg_forward.1} parent=1 // pred_fallthru
      _
    // Predicated region
    $region6: #{vgg_forward.1} parent=1 // pred_check
      _
    $region7: #{vgg_forward.1} parent=1 // pred_check_branch
      %12 = sbr.rel (0) target = $region9
    $region8: #{vgg_forward.1} parent=1 // pred_region
      _
    $region9: #{vgg_forward.1} parent=1 // pred_fallthru
      _
    // Predicated region
    $region10: #{vgg_forward.1} parent=1 // pred_check
      _
    $region11: #{vgg_forward.1} parent=1 // pred_check_branch
      %14 = sbr.rel (0) target = $region13
    $region12: #{vgg_forward.1} parent=1 // pred_region
      _
    $region13: #{vgg_forward.1} parent=1 // pred_fallthru
      _
    %v15 = vld [vmem:[%s0] sm:$0xff]
    %v16 = vld [vmem:[%s1] sm:$0xf]
    %v17 = vld [vmem:[%s1 + $0x4] sm:$0xf]
    %v18 = vld [vmem:[%s1 + $0x8] sm:$0xf]
    %v19 = vld [vmem:[%s1 + $0xc] sm:$0xf]
    %v20 = vld [vmem:[%s1 + $0x10] sm:$0xf]
    %v21 = vld [vmem:[%s1 + $0x14] sm:$0xf]
    %v22 = vld [vmem:[%s1 + $0x18] sm:$0xf]
    %v23 = vld [vmem:[%s1 + $0x1c] sm:$0xf]
    %v24 = vld [vmem:[%s1 + $0x20] sm:$0xf]
    %v25 = vld [vmem:[%s1 + $0x24] sm:$0xf]
    %v26 = vld [vmem:[%s1 + $0x28] sm:$0xf]
    %v27 = vld [vmem:[%s1 + $0x2c] sm:$0xf]
    %v28 = vld [vmem:[%s1 + $0x30] sm:$0xf]
    %v29 = vld [vmem:[%s1 + $0x34] sm:$0xf]
    %v30 = vld [vmem:[%s1 + $0x38] sm:$0xf]
    %v31 = vld [vmem:[%s1 + $0x3c] sm:$0xf]
    %v32 = vld [vmem:[%s1 + $0x40] sm:$0xf]
    %v33 = vld [vmem:[%s1 + $0x44] sm:$0xf]
    %v34 = vld [vmem:[%s1 + $0x48] sm:$0xf]
    %v35 = vld [vmem:[%s1 + $0x4c] sm:$0xf]
    %v36 = vld [vmem:[%s1 + $0x50] sm:$0xf]
    %v37 = vld [vmem:[%s1 + $0x54] sm:$0xf]
    %v38 = vld [vmem:[%s1 + $0x58] sm:$0xf]
    %v39 = vld [vmem:[%s1 + $0x5c] sm:$0xf]
    %v40 = vld [vmem:[%s1 + $0x60] sm:$0xf]
    %v41 = vld [vmem:[%s1 + $0x64] sm:$0xf]
    %v42 = vld [vmem:[%s1 + $0x68] sm:$0xf]
    %v43 = vld [vmem:[%s1 + $0x6c] sm:$0xf]
    %v44 = vld [vmem:[%s1 + $0x70] sm:$0xf]
    %v45 = vld [vmem:[%s1 + $0x74] sm:$0xf]
    %v46 = vld [vmem:[%s1 + $0x78] sm:$0xf]
    %v47 = vld [vmem:[%s1 + $0x7c] sm:$0xf]
    %v48 = vld [vmem:[%s1 + $0x80] sm:$0xf]
    %v49 = vld [vmem:[%s1 + $0x84] sm:$0xf]
    %v50 = vld [vmem:[%s1 + $0x88] sm:$0xf]
    %v51 = vld [vmem:[%s1 + $0x8c] sm:$0xf]
    %v52 = vld [vmem:[%s1 + $0x90] sm:$0xf]
    %v53 = vld [vmem:[%s1 + $0x94] sm:$0xf]
    %v54 = vld [vmem:[%s1 + $0x98] sm:$0xf]
    %v55 = vld [vmem:[%s1 + $0x9c] sm:$0xf]
    %v56 = vld [vmem:[%s1 + $0xa0] sm:$0xf]
    %v57 = vld [vmem:[%s1 + $0xa4] sm:$0xf]
    %v58 = vld [vmem:[%s1 + $0xa8] sm:$0xf]
    %v59 = vld [vmem:[%s1 + $0xac] sm:$0xf]
    %v60 = vld [vmem:[%s1 + $0xb0] sm:$0xf]
    %v61 = vld [vmem:[%s1 + $0xb4] sm:$0xf]
    %v62 = vld [vmem:[%s1 + $0xb8] sm:$0xf]
    %v63 = vld [vmem:[%s1 + $0xbc] sm:$0xf]
    %v64 = vld [vmem:[%s1 + $0xc0] sm:$0xf]
    %v65 = vld [vmem:[%s1 + $0xc4] sm:$0xf]
    %v66 = vld [vmem:[%s1 + $0xc8] sm:$0xf]
    %v67 = vld [vmem:[%s1 + $0xcc] sm:$0xf]
    %v68 = vld [vmem:[%s1 + $0xd0] sm:$0xf]
    %v69 = vld [vmem:[%s1 + $0xd4] sm:$0xf]
    %v70 = vld [vmem:[%s1 + $0xd8] sm:$0xf]
    %v71 = vld [vmem:[%s1 + $0xdc] sm:$0xf]
    %v72 = vld [vmem:[%s1 + $0xe0] sm:$0xf]
    %v73 = vld [vmem:[%s1 + $0xe4] sm:$0xf]
    %v74 = vld [vmem:[%s1 + $0xe8] sm:$0xf]
    %v75 = vld [vmem:[%s1 + $0xec] sm:$0xf]
    %v76 = vld [vmem:[%s1 + $0xf0] sm:$0xf]
    %v77 = vld [vmem:[%s1 + $0xf4] sm:$0xf]
    %v78 = vld [vmem:[%s1 + $0xf8] sm:$0xf]
    %v79 = vld [vmem:[%s1 + $0xfc] sm:$0xf]
    %v80 = vld [vmem:[%s1 + $0x100] sm:$0xf]
    %v81 = vld [vmem:[%s1 + $0x104] sm:$0xf]
    %v82 = vld [vmem:[%s1 + $0x108] sm:$0xf]
    %v83 = vld [vmem:[%s1 + $0x10c] sm:$0xf]
    %v84 = vld [vmem:[%s1 + $0x110] sm:$0xf]
    %v85 = vld [vmem:[%s1 + $0x114] sm:$0xf]
    %v86 = vld [vmem:[%s1 + $0x118] sm:$0xf]
    %v87 = vld [vmem:[%s1 + $0x11c] sm:$0xf]
    %v88 = vld [vmem:[%s1 + $0x120] sm:$0xf]
    %v89 = vld [vmem:[%s1 + $0x124] sm:$0xf]
    %v90 = vld [vmem:[%s1 + $0x128] sm:$0xf]
    %v91 = vld [vmem:[%s1 + $0x12c] sm:$0xf]
    %v92 = vld [vmem:[%s1 + $0x130] sm:$0xf]
    %v93 = vld [vmem:[%s1 + $0x134] sm:$0xf]
    %v94 = vld [vmem:[%s1 + $0x138] sm:$0xf]
    %v95 = vld [vmem:[%s1 + $0x13c] sm:$0xf]
    %v96 = vld [vmem:[%s1 + $0x140] sm:$0xf]
    %v97 = vld [vmem:[%s1 + $0x144] sm:$0xf]
    %v98 = vld [vmem:[%s1 + $0x148] sm:$0xf]
    %v99 = vld [vmem:[%s1 + $0x14c] sm:$0xf]
    %v100 = vld [vmem:[%s1 + $0x150] sm:$0xf]
    %v101 = vld [vmem:[%s1 + $0x154] sm:$0xf]
    %v102 = vld [vmem:[%s1 + $0x158] sm:$0xf]
    %v103 = vld [vmem:[%s1 + $0x15c] sm:$0xf]
    %v104 = vld [vmem:[%s1 + $0x160] sm:$0xf]
    %v105 = vld [vmem:[%s1 + $0x164] sm:$0xf]
    %v106 = vld [vmem:[%s1 + $0x168] sm:$0xf]
    %v107 = vld [vmem:[%s1 + $0x16c] sm:$0xf]
    %v108 = vld [vmem:[%s1 + $0x170] sm:$0xf]
    %v109 = vld [vmem:[%s1 + $0x174] sm:$0xf]
    %v110 = vld [vmem:[%s1 + $0x178] sm:$0xf]
    %v111 = vld [vmem:[%s1 + $0x17c] sm:$0xf]
    %v112 = vld [vmem:[%s1 + $0x180] sm:$0xf]
    %v113 = vld [vmem:[%s1 + $0x184] sm:$0xf]
    %v114 = vld [vmem:[%s1 + $0x188] sm:$0xf]
    %v115 = vld [vmem:[%s1 + $0x18c] sm:$0xf]
    %v116 = vld [vmem:[%s1 + $0x190] sm:$0xf]
    %v117 = vld [vmem:[%s1 + $0x194] sm:$0xf]
    %v118 = vld [vmem:[%s1 + $0x198] sm:$0xf]
    %v119 = vld [vmem:[%s1 + $0x19c] sm:$0xf]
    %v120 = vld [vmem:[%s1 + $0x1a0] sm:$0xf]
    %v121 = vld [vmem:[%s1 + $0x1a4] sm:$0xf]
    %v122 = vld [vmem:[%s1 + $0x1a8] sm:$0xf]
    %v123 = vld [vmem:[%s1 + $0x1ac] sm:$0xf]
    %v124 = vld [vmem:[%s1 + $0x1b0] sm:$0xf]
    %v125 = vld [vmem:[%s1 + $0x1b4] sm:$0xf]
    %v126 = vld [vmem:[%s1 + $0x1b8] sm:$0xf]
    %v127 = vld [vmem:[%s1 + $0x1bc] sm:$0xf]
    %v128 = vld [vmem:[%s1 + $0x1c0] sm:$0xf]
    %v129 = vld [vmem:[%s1 + $0x1c4] sm:$0xf]
    %v130 = vld [vmem:[%s1 + $0x1c8] sm:$0xf]
    %v131 = vld [vmem:[%s1 + $0x1cc] sm:$0xf]
    %v132 = vld [vmem:[%s1 + $0x1d0] sm:$0xf]
    %v133 = vld [vmem:[%s1 + $0x1d4] sm:$0xf]
    %v134 = vld [vmem:[%s1 + $0x1d8] sm:$0xf]
    %v135 = vld [vmem:[%s1 + $0x1dc] sm:$0xf]
    %v136 = vld [vmem:[%s1 + $0x1e0] sm:$0xf]
    %v137 = vld [vmem:[%s1 + $0x1e4] sm:$0xf]
    %v138 = vld [vmem:[%s1 + $0x1e8] sm:$0xf]
    %v139 = vld [vmem:[%s1 + $0x1ec] sm:$0xf]
    %v140 = vld [vmem:[%s1 + $0x1f0] sm:$0xf]
    %v141 = vld [vmem:[%s1 + $0x1f4] sm:$0xf]
    %v142 = vld [vmem:[%s1 + $0x1f8] sm:$0xf]
    %v143 = vld [vmem:[%s1 + $0x1fc] sm:$0xf]
    %v144 = vld [vmem:[%s2] sm:$0x1]
    %v146 = vperm.slane %v144, 0
    %149 = vst [vmem:[#allocation1] ss:$9 sm:$0xff] %v15
    %v150 = vld [vmem:[#allocation1] sm:$0xff]
    %v151 = vld [vmem:[#allocation1 + $0x9] sm:$0xff]
    %v152 = vld [vmem:[#allocation1 + $0x12] sm:$0xff]
    %v153 = vld [vmem:[#allocation1 + $0x1b] sm:$0xff]
    %v154 = vld [vmem:[#allocation1 + $0x24] sm:$0xff]
    %v155 = vld [vmem:[#allocation1 + $0x2d] sm:$0xff]
    %v156 = vld [vmem:[#allocation1 + $0x36] sm:$0xff]
    %v157 = vld [vmem:[#allocation1 + $0x3f] sm:$0xff]
    %v294 = vunpack.c.l.b16 %v16
    %v295 = vunpack.c.l.b16 %v17
    %v296 = vunpack.c.l.b16 %v18
    %v297 = vunpack.c.l.b16 %v19
    %v298 = vunpack.c.l.b16 %v20
    %v299 = vunpack.c.l.b16 %v21
    %v300 = vunpack.c.l.b16 %v22
    %v301 = vunpack.c.l.b16 %v23
    %v302 = vunpack.c.l.b16 %v24
    %v303 = vunpack.c.l.b16 %v25
    %v304 = vunpack.c.l.b16 %v26
    %v305 = vunpack.c.l.b16 %v27
    %v306 = vunpack.c.l.b16 %v28
    %v307 = vunpack.c.l.b16 %v29
    %v308 = vunpack.c.l.b16 %v30
    %v309 = vunpack.c.l.b16 %v31
    %v310 = vunpack.c.l.b16 %v32
    %v311 = vunpack.c.l.b16 %v33
    %v312 = vunpack.c.l.b16 %v34
    %v313 = vunpack.c.l.b16 %v35
    %v314 = vunpack.c.l.b16 %v36
    %v315 = vunpack.c.l.b16 %v37
    %v316 = vunpack.c.l.b16 %v38
    %v317 = vunpack.c.l.b16 %v39
    %v318 = vunpack.c.l.b16 %v40
    %v319 = vunpack.c.l.b16 %v41
    %v320 = vunpack.c.l.b16 %v42
    %v321 = vunpack.c.l.b16 %v43
    %v322 = vunpack.c.l.b16 %v44
    %v323 = vunpack.c.l.b16 %v45
    %v324 = vunpack.c.l.b16 %v46
    %v325 = vunpack.c.l.b16 %v47
    %v326 = vunpack.c.l.b16 %v48
    %v327 = vunpack.c.l.b16 %v49
    %v328 = vunpack.c.l.b16 %v50
    %v329 = vunpack.c.l.b16 %v51
    %v330 = vunpack.c.l.b16 %v52
    %v331 = vunpack.c.l.b16 %v53
    %v332 = vunpack.c.l.b16 %v54
    %v333 = vunpack.c.l.b16 %v55
    %v334 = vunpack.c.l.b16 %v56
    %v335 = vunpack.c.l.b16 %v57
    %v336 = vunpack.c.l.b16 %v58
    %v337 = vunpack.c.l.b16 %v59
    %v338 = vunpack.c.l.b16 %v60
    %v339 = vunpack.c.l.b16 %v61
    %v340 = vunpack.c.l.b16 %v62
    %v341 = vunpack.c.l.b16 %v63
    %v342 = vunpack.c.l.b16 %v64
    %v343 = vunpack.c.l.b16 %v65
    %v344 = vunpack.c.l.b16 %v66
    %v345 = vunpack.c.l.b16 %v67
    %v346 = vunpack.c.l.b16 %v68
    %v347 = vunpack.c.l.b16 %v69
    %v348 = vunpack.c.l.b16 %v70
    %v349 = vunpack.c.l.b16 %v71
    %v350 = vunpack.c.l.b16 %v72
    %v351 = vunpack.c.l.b16 %v73
    %v352 = vunpack.c.l.b16 %v74
    %v353 = vunpack.c.l.b16 %v75
    %v354 = vunpack.c.l.b16 %v76
    %v355 = vunpack.c.l.b16 %v77
    %v356 = vunpack.c.l.b16 %v78
    %v357 = vunpack.c.l.b16 %v79
    %v358 = vunpack.c.l.b16 %v80
    %v359 = vunpack.c.l.b16 %v81
    %v360 = vunpack.c.l.b16 %v82
    %v361 = vunpack.c.l.b16 %v83
    %v362 = vunpack.c.l.b16 %v84
    %v363 = vunpack.c.l.b16 %v85
    %v364 = vunpack.c.l.b16 %v86
    %v365 = vunpack.c.l.b16 %v87
    %v366 = vunpack.c.l.b16 %v88
    %v367 = vunpack.c.l.b16 %v89
    %v368 = vunpack.c.l.b16 %v90
    %v369 = vunpack.c.l.b16 %v91
    %v370 = vunpack.c.l.b16 %v92
    %v371 = vunpack.c.l.b16 %v93
    %v372 = vunpack.c.l.b16 %v94
    %v373 = vunpack.c.l.b16 %v95
    %v374 = vunpack.c.l.b16 %v96
    %v375 = vunpack.c.l.b16 %v97
    %v376 = vunpack.c.l.b16 %v98
    %v377 = vunpack.c.l.b16 %v99
    %v378 = vunpack.c.l.b16 %v100
    %v379 = vunpack.c.l.b16 %v101
    %v380 = vunpack.c.l.b16 %v102
    %v381 = vunpack.c.l.b16 %v103
    %v382 = vunpack.c.l.b16 %v104
    %v383 = vunpack.c.l.b16 %v105
    %v384 = vunpack.c.l.b16 %v106
    %v385 = vunpack.c.l.b16 %v107
    %v386 = vunpack.c.l.b16 %v108
    %v387 = vunpack.c.l.b16 %v109
    %v388 = vunpack.c.l.b16 %v110
    %v389 = vunpack.c.l.b16 %v111
    %v390 = vunpack.c.l.b16 %v112
    %v391 = vunpack.c.l.b16 %v113
    %v392 = vunpack.c.l.b16 %v114
    %v393 = vunpack.c.l.b16 %v115
    %v394 = vunpack.c.l.b16 %v116
    %v395 = vunpack.c.l.b16 %v117
    %v396 = vunpack.c.l.b16 %v118
    %v397 = vunpack.c.l.b16 %v119
    %v398 = vunpack.c.l.b16 %v120
    %v399 = vunpack.c.l.b16 %v121
    %v400 = vunpack.c.l.b16 %v122
    %v401 = vunpack.c.l.b16 %v123
    %v402 = vunpack.c.l.b16 %v124
    %v403 = vunpack.c.l.b16 %v125
    %v404 = vunpack.c.l.b16 %v126
    %v405 = vunpack.c.l.b16 %v127
    %v406 = vunpack.c.l.b16 %v128
    %v407 = vunpack.c.l.b16 %v129
    %v408 = vunpack.c.l.b16 %v130
    %v409 = vunpack.c.l.b16 %v131
    %v410 = vunpack.c.l.b16 %v132
    %v411 = vunpack.c.l.b16 %v133
    %v412 = vunpack.c.l.b16 %v134
    %v413 = vunpack.c.l.b16 %v135
    %v414 = vunpack.c.l.b16 %v136
    %v415 = vunpack.c.l.b16 %v137
    %v416 = vunpack.c.l.b16 %v138
    %v417 = vunpack.c.l.b16 %v139
    %v418 = vunpack.c.l.b16 %v140
    %v419 = vunpack.c.l.b16 %v141
    %v420 = vunpack.c.l.b16 %v142
    %v421 = vunpack.c.l.b16 %v143
    %v422 = vpack.c.b16 %v295, %v294
    %v423 = vpack.c.b16 %v297, %v296
    %v424 = vpack.c.b16 %v299, %v298
    %v425 = vpack.c.b16 %v301, %v300
    %v426 = vpack.c.b16 %v303, %v302
    %v427 = vpack.c.b16 %v305, %v304
    %v428 = vpack.c.b16 %v307, %v306
    %v429 = vpack.c.b16 %v309, %v308
    %v430 = vpack.c.b16 %v311, %v310
    %v431 = vpack.c.b16 %v313, %v312
    %v432 = vpack.c.b16 %v315, %v314
    %v433 = vpack.c.b16 %v317, %v316
    %v434 = vpack.c.b16 %v319, %v318
    %v435 = vpack.c.b16 %v321, %v320
    %v436 = vpack.c.b16 %v323, %v322
    %v437 = vpack.c.b16 %v325, %v324
    %v438 = vpack.c.b16 %v327, %v326
    %v439 = vpack.c.b16 %v329, %v328
    %v440 = vpack.c.b16 %v331, %v330
    %v441 = vpack.c.b16 %v333, %v332
    %v442 = vpack.c.b16 %v335, %v334
    %v443 = vpack.c.b16 %v337, %v336
    %v444 = vpack.c.b16 %v339, %v338
    %v445 = vpack.c.b16 %v341, %v340
    %v446 = vpack.c.b16 %v343, %v342
    %v447 = vpack.c.b16 %v345, %v344
    %v448 = vpack.c.b16 %v347, %v346
    %v449 = vpack.c.b16 %v349, %v348
    %v450 = vpack.c.b16 %v351, %v350
    %v451 = vpack.c.b16 %v353, %v352
    %v452 = vpack.c.b16 %v355, %v354
    %v453 = vpack.c.b16 %v357, %v356
    %v454 = vpack.c.b16 %v359, %v358
    %v455 = vpack.c.b16 %v361, %v360
    %v456 = vpack.c.b16 %v363, %v362
    %v457 = vpack.c.b16 %v365, %v364
    %v458 = vpack.c.b16 %v367, %v366
    %v459 = vpack.c.b16 %v369, %v368
    %v460 = vpack.c.b16 %v371, %v370
    %v461 = vpack.c.b16 %v373, %v372
    %v462 = vpack.c.b16 %v375, %v374
    %v463 = vpack.c.b16 %v377, %v376
    %v464 = vpack.c.b16 %v379, %v378
    %v465 = vpack.c.b16 %v381, %v380
    %v466 = vpack.c.b16 %v383, %v382
    %v467 = vpack.c.b16 %v385, %v384
    %v468 = vpack.c.b16 %v387, %v386
    %v469 = vpack.c.b16 %v389, %v388
    %v470 = vpack.c.b16 %v391, %v390
    %v471 = vpack.c.b16 %v393, %v392
    %v472 = vpack.c.b16 %v395, %v394
    %v473 = vpack.c.b16 %v397, %v396
    %v474 = vpack.c.b16 %v399, %v398
    %v475 = vpack.c.b16 %v401, %v400
    %v476 = vpack.c.b16 %v403, %v402
    %v477 = vpack.c.b16 %v405, %v404
    %v478 = vpack.c.b16 %v407, %v406
    %v479 = vpack.c.b16 %v409, %v408
    %v480 = vpack.c.b16 %v411, %v410
    %v481 = vpack.c.b16 %v413, %v412
    %v482 = vpack.c.b16 %v415, %v414
    %v483 = vpack.c.b16 %v417, %v416
    %v484 = vpack.c.b16 %v419, %v418
    %v485 = vpack.c.b16 %v421, %v420
    %550 = vmatpush.bf16.msra.mxu0 %v429
    %551 = vmatpush.bf16.msra.mxu0 %v428
    %552 = vmatpush.bf16.msra.mxu0 %v427
    %553 = vmatpush.bf16.msra.mxu0 %v426
    %554 = vmatpush.bf16.msra.mxu0 %v425
    %555 = vmatpush.bf16.msra.mxu0 %v424
    %556 = vmatpush.bf16.msra.mxu0 %v423
    %557 = vmatpush.bf16.msra.mxu0 %v422
    %558 = vmatmul.bf16.gmra.mxu0 %v150
    %v559 = vpop.f32.mrf.mxu0
    %v560 = vadd.f32 %v146, %v559
    %v561 = vpop.f32.mrf.mxu0
    %562 = vdwg.mxu0
    %563 = vmatpush.bf16.msra.mxu0 %v437
    %564 = vmatpush.bf16.msra.mxu0 %v436
    %565 = vmatpush.bf16.msra.mxu0 %v435
    %566 = vmatpush.bf16.msra.mxu0 %v434
    %567 = vmatpush.bf16.msra.mxu0 %v433
    %568 = vmatpush.bf16.msra.mxu0 %v432
    %569 = vmatpush.bf16.msra.mxu0 %v431
    %570 = vmatpush.bf16.msra.mxu0 %v430
    %571 = vmatmul.bf16.gmra.mxu0 %v151
    %v572 = vpop.f32.mrf.mxu0
    %v573 = vadd.f32 %v560, %v572
    %v574 = vpop.f32.mrf.mxu0
    %575 = vdwg.mxu0
    %576 = vmatpush.bf16.msra.mxu0 %v445
    %577 = vmatpush.bf16.msra.mxu0 %v444
    %578 = vmatpush.bf16.msra.mxu0 %v443
    %579 = vmatpush.bf16.msra.mxu0 %v442
    %580 = vmatpush.bf16.msra.mxu0 %v441
    %581 = vmatpush.bf16.msra.mxu0 %v440
    %582 = vmatpush.bf16.msra.mxu0 %v439
    %583 = vmatpush.bf16.msra.mxu0 %v438
    %584 = vmatmul.bf16.gmra.mxu0 %v152
    %v585 = vpop.f32.mrf.mxu0
    %v586 = vadd.f32 %v573, %v585
    %v587 = vpop.f32.mrf.mxu0
    %588 = vdwg.mxu0
    %589 = vmatpush.bf16.msra.mxu0 %v453
    %590 = vmatpush.bf16.msra.mxu0 %v452
    %591 = vmatpush.bf16.msra.mxu0 %v451
    %592 = vmatpush.bf16.msra.mxu0 %v450
    %593 = vmatpush.bf16.msra.mxu0 %v449
    %594 = vmatpush.bf16.msra.mxu0 %v448
    %595 = vmatpush.bf16.msra.mxu0 %v447
    %596 = vmatpush.bf16.msra.mxu0 %v446
    %597 = vmatmul.bf16.gmra.mxu0 %v153
    %v598 = vpop.f32.mrf.mxu0
    %v599 = vadd.f32 %v586, %v598
    %v600 = vpop.f32.mrf.mxu0
    %601 = vdwg.mxu0
    %602 = vmatpush.bf16.msra.mxu0 %v461
    %603 = vmatpush.bf16.msra.mxu0 %v460
    %604 = vmatpush.bf16.msra.mxu0 %v459
    %605 = vmatpush.bf16.msra.mxu0 %v458
    %606 = vmatpush.bf16.msra.mxu0 %v457
    %607 = vmatpush.bf16.msra.mxu0 %v456
    %608 = vmatpush.bf16.msra.mxu0 %v455
    %609 = vmatpush.bf16.msra.mxu0 %v454
    %610 = vmatmul.bf16.gmra.mxu0 %v154
    %v611 = vpop.f32.mrf.mxu0
    %v612 = vadd.f32 %v599, %v611
    %v613 = vpop.f32.mrf.mxu0
    %614 = vdwg.mxu0
    %615 = vmatpush.bf16.msra.mxu0 %v469
    %616 = vmatpush.bf16.msra.mxu0 %v468
    %617 = vmatpush.bf16.msra.mxu0 %v467
    %618 = vmatpush.bf16.msra.mxu0 %v466
    %619 = vmatpush.bf16.msra.mxu0 %v465
    %620 = vmatpush.bf16.msra.mxu0 %v464
    %621 = vmatpush.bf16.msra.mxu0 %v463
    %622 = vmatpush.bf16.msra.mxu0 %v462
    %623 = vmatmul.bf16.gmra.mxu0 %v155
    %v624 = vpop.f32.mrf.mxu0
    %v625 = vadd.f32 %v612, %v624
    %v626 = vpop.f32.mrf.mxu0
    %627 = vdwg.mxu0
    %628 = vmatpush.bf16.msra.mxu0 %v477
    %629 = vmatpush.bf16.msra.mxu0 %v476
    %630 = vmatpush.bf16.msra.mxu0 %v475
    %631 = vmatpush.bf16.msra.mxu0 %v474
    %632 = vmatpush.bf16.msra.mxu0 %v473
    %633 = vmatpush.bf16.msra.mxu0 %v472
    %634 = vmatpush.bf16.msra.mxu0 %v471
    %635 = vmatpush.bf16.msra.mxu0 %v470
    %636 = vmatmul.bf16.gmra.mxu0 %v156
    %v637 = vpop.f32.mrf.mxu0
    %v638 = vadd.f32 %v625, %v637
    %v639 = vpop.f32.mrf.mxu0
    %640 = vdwg.mxu0
    %641 = vmatpush.bf16.msra.mxu0 %v485
    %642 = vmatpush.bf16.msra.mxu0 %v484
    %643 = vmatpush.bf16.msra.mxu0 %v483
    %644 = vmatpush.bf16.msra.mxu0 %v482
    %645 = vmatpush.bf16.msra.mxu0 %v481
    %646 = vmatpush.bf16.msra.mxu0 %v480
    %647 = vmatpush.bf16.msra.mxu0 %v479
    %648 = vmatpush.bf16.msra.mxu0 %v478
    %649 = vmatmul.bf16.gmra.mxu0 %v157
    %v650 = vpop.f32.mrf.mxu0
    %v651 = vadd.f32 %v638, %v650
    %v652 = vpop.f32.mrf.mxu0
    %653 = vdwg.mxu0
    %654 = vst [vmem:[#allocation2] sm:$0x3] %v651
    // Predicated region
    $region14: #{vgg_forward.1} parent=1 // pred_check
      _
    $region15: #{vgg_forward.1} parent=1 // pred_check_branch
      %656 = sbr.rel (0) target = $region17
    $region16: #{vgg_forward.1} parent=1 // pred_region
      %658 = vsyncadd [#allocation3], 0
      %s660 = sshll.u32 [#allocation2], 4
      %s661 = int_to_ptr.vmem [resolvable:$true] %s660
      %s662 = sshll.u32 %s3, 4
      %s663 = int_to_ptr.hbm [resolvable:$true] %s662
      %665 = dma.vmem_to_hbm [thread:$0]  %s661, 32, %s663, [#allocation3]
    $region17: #{vgg_forward.1} parent=1 // pred_fallthru
      _
    // Predicated region
    $region18: #{vgg_forward.1} parent=1 // pred_check
      _
    $region19: #{vgg_forward.1} parent=1 // pred_check_branch
      %667 = sbr.rel (0) target = $region21
    $region20: #{vgg_forward.1} parent=1 // pred_region
      %669 = dma.done [#allocation3], 32
    $region21: #{vgg_forward.1} parent=1 // pred_fallthru
      _
    %670 = vsyncpa [#allocation3], 1

</llo_original>
